<compile_context>
chip_gen: v5e
topology: v5e:2x2
jax: 0.10.0
libtpu: 0.0.40
codegen_flags: <defaults>
</compile_context>

<pallas_src>
import functools

import jax
import jax.numpy as jnp
import numpy as np
from jax import lax
from jax.experimental import pallas as pl
from jax.experimental.pallas import tpu as pltpu


def _pick_time_block(T, target):
    """Largest tb <= target with T % tb == 0 and (tb == T or tb % 8 == 0)."""
    if T <= target:
        return T
    for tb in range(min(target, T), 0, -1):
        if T % tb == 0 and tb % 8 == 0:
            return tb
    return T


# ----------------------------------------------------------------------------
# Kernel 1: hoisted input projection (both directions at once) + time-mean
#   gx[d, b, t, :] = emb[b, t, :] @ W_ih_d^T + (b_ih_d + b_hh_d)   (gate order i,f,o,g)
# ----------------------------------------------------------------------------
def _input_proj_kernel(emb_ref, w_ref, b_ref, gx_ref, mean_ref, *, seq_len, h4):
    k = pl.program_id(0)

    @pl.when(k == 0)
    def _():
        mean_ref[...] = jnp.zeros_like(mean_ref)

    emb = emb_ref[...]                                     # (B, TBp, E)
    B, TBp, E = emb.shape
    # One big MXU matmul: (B*TBp, E) @ (E, 8H); N = 8H keeps the MXU lane dim wide (>=256 when
    # H>=32) as suggested for v6e/v7x.
    gates = jnp.dot(emb.reshape(B * TBp, E), w_ref[...],
                    preferred_element_type=jnp.float32) + b_ref[...]     # (B*TBp, 8H)
    gates = gates.reshape(B, TBp, 2 * h4)
    gx_ref[0] = gates[:, :, :h4]                           # forward-direction gates
    gx_ref[1] = gates[:, :, h4:]                           # backward-direction gates
    mean_ref[...] += jnp.sum(emb, axis=1)                  # accumulate time-sum

    @pl.when(k == pl.num_programs(0) - 1)
    def _():
        mean_ref[...] = mean_ref[...] * (1.0 / seq_len)


def input_projection_and_mean(emb, w_proj, b_proj, *, time_block=128):
    """emb: (B,T,E) f32; w_proj: (E, 8H) = [W_ih_fwd^T | W_ih_bwd^T] (gate-permuted);
    b_proj: (1, 8H).  Returns gx (2,B,T,4H) and the embedding time-mean (B,E)."""
    B, T, E = emb.shape
    H8 = w_proj.shape[1]
    h4 = H8 // 2
    tbp = _pick_time_block(T, time_block)
    nk = T // tbp
    kern = functools.partial(_input_proj_kernel, seq_len=T, h4=h4)
    return pl.pallas_call(
        kern,
        out_shape=(jax.ShapeDtypeStruct((2, B, T, h4), jnp.float32),
                   jax.ShapeDtypeStruct((B, E), jnp.float32)),
        grid_spec=pltpu.PrefetchScalarGridSpec(
            num_scalar_prefetch=0,
            grid=(nk,),
            in_specs=[pl.BlockSpec((B, tbp, E), lambda k: (0, k, 0)),
                      pl.BlockSpec((E, H8), lambda k: (0, 0)),
                      pl.BlockSpec((1, H8), lambda k: (0, 0))],
            out_specs=[pl.BlockSpec((2, B, tbp, h4), lambda k: (0, 0, k, 0)),
                       pl.BlockSpec((B, E), lambda k: (0, 0))]),
        # mean output accumulates across the time-block axis -> must stay on one core.
        compiler_params=pltpu.CompilerParams(dimension_semantics=("arbitrary",)),
    )(emb, w_proj, b_proj)


# ----------------------------------------------------------------------------
# Kernel 2: fused bidirectional LSTM recurrence (only h @ W_hh on the sequential path)
# ----------------------------------------------------------------------------
def _bilstm_block(gx_ref, whh, out_ref, h_sc, c_sc, taus, H):
    h = h_sc[...]
    c = c_sc[...]
    for tau in taus:   # static within-block order (fwd: 0..TB-1, bwd: TB-1..0), fully unrolled
        gates = gx_ref[0, :, tau, :] + jnp.dot(h, whh,
                                               preferred_element_type=jnp.float32)  # (B, 4H)
        s = jax.nn.sigmoid(gates[:, :3 * H])      # i | f | o  (one contiguous sigmoid region)
        g = jnp.tanh(gates[:, 3 * H:])            # g
        c = s[:, H:2 * H] * c + s[:, :H] * g
        h = s[:, 2 * H:3 * H] * jnp.tanh(c)
        out_ref[0, :, tau, :] = h
    h_sc[...] = h
    c_sc[...] = c


def _bilstm_kernel(gx_ref, whh_ref, out_ref, h_sc, c_sc, *, hidden, tb):
    d = pl.program_id(0)      # 0 = forward, 1 = backward

    @pl.when(pl.program_id(1) == 0)   # start of each direction: reset carried state
    def _():
        h_sc[...] = jnp.zeros_like(h_sc)
        c_sc[...] = jnp.zeros_like(c_sc)

    # Block index of W_hh only depends on d -> DMA'd once per direction, not per time block.
    whh = whh_ref[0]          # (H, 4H)

    @pl.when(d == 0)
    def _():
        _bilstm_block(gx_ref, whh, out_ref, h_sc, c_sc, tuple(range(tb)), hidden)

    @pl.when(d == 1)
    def _():
        _bilstm_block(gx_ref, whh, out_ref, h_sc, c_sc, tuple(reversed(range(tb))), hidden)


def bidirectional_lstm(gx, whh_stacked, *, time_block=8):
    """gx: (2,B,T,4H) precomputed x-gates (+bias); whh_stacked: (2,H,4H).
    Returns (2,B,T,H) hidden states (backward half already un-reversed in time)."""
    _, B, T, H4 = gx.shape
    H = H4 // 4
    tb = _pick_time_block(T, time_block)
    nk = T // tb

    def rev_k(d, k):
        # forward: block k ; backward: block nk-1-k (time reversal as pure index arithmetic)
        return (1 - d) * k + d * (nk - 1 - k)

    kern = functools.partial(_bilstm_kernel, hidden=H, tb=tb)
    # TODO(synk): for production sizes, cast gx/W_hh to bf16 (f32 accumulation), single-buffer
    # the loop-invariant weights and set vmem_limit_bytes for v7x's 64 MiB VMEM.
    return pl.pallas_call(
        kern,
        out_shape=jax.ShapeDtypeStruct((2, B, T, H), jnp.float32),
        grid_spec=pltpu.PrefetchScalarGridSpec(
            num_scalar_prefetch=0,
            grid=(2, nk),
            in_specs=[pl.BlockSpec((1, B, tb, H4), lambda d, k: (d, 0, rev_k(d, k), 0)),
                      pl.BlockSpec((1, H, H4), lambda d, k: (d, 0, 0))],
            out_specs=pl.BlockSpec((1, B, tb, H), lambda d, k: (d, 0, rev_k(d, k), 0)),
            scratch_shapes=[pltpu.VMEM((B, H), jnp.float32),
                            pltpu.VMEM((B, H), jnp.float32)]),
        compiler_params=pltpu.CompilerParams(
            # direction axis is fully independent -> megacore-parallel on v7x;
            # time axis carries h/c in scratch -> sequential ("arbitrary").
            dimension_semantics=("parallel", "arbitrary")),
    )(gx, whh_stacked)


# ----------------------------------------------------------------------------
# EncoderRNN wrapper (parameter setup + glue in plain JAX)
# ----------------------------------------------------------------------------
class EncoderRNNPallas:
    def __init__(self, input_size, emb_size, padding_idx, hidden_size, key,
                 lstm_time_block=8, proj_time_block=128):
        V, E, H = input_size, emb_size, hidden_size
        keys = jax.random.split(key, 10)
        # Embedding table: N(0,1), padding row zeroed (PyTorch padding_idx semantics).
        table = jax.random.normal(keys[0], (V, E), jnp.float32)
        self.table = table.at[padding_idx].set(0.0)

        # LSTM params, PyTorch-style U(-1/sqrt(H), 1/sqrt(H)), PyTorch gate order (i,f,g,o).
        bound = 1.0 / np.sqrt(H)

        def u(k, shape):
            return jax.random.uniform(k, shape, jnp.float32, -bound, bound)

        # Gate-column permutation (i,f,g,o) -> (i,f,o,g): sigmoid gates become contiguous lanes.
        perm = np.concatenate([np.arange(0, 2 * H),        # i, f
                               np.arange(3 * H, 4 * H),    # o
                               np.arange(2 * H, 3 * H)])   # g
        self.params = {}
        w_ih_cols, bias_cols, whh_list = [], [], []
        for dname, off in (("fwd", 1), ("bwd", 5)):
            w_ih = u(keys[off + 0], (4 * H, E))
            w_hh = u(keys[off + 1], (4 * H, H))
            b_ih = u(keys[off + 2], (4 * H,))
            b_hh = u(keys[off + 3], (4 * H,))
            self.params[dname] = dict(w_ih=w_ih, w_hh=w_hh, b_ih=b_ih, b_hh=b_hh)  # for reference
            w_ih_cols.append(w_ih[perm].T)                 # (E, 4H), permuted gate order
            whh_list.append(w_hh[perm].T)                  # (H, 4H)
            bias_cols.append((b_ih + b_hh)[perm])          # (4H,)

        # Kernel-layout parameters.
        self.w_proj = jnp.concatenate(w_ih_cols, axis=1)   # (E, 8H) = [fwd | bwd]
        self.b_proj = jnp.concatenate(bias_cols)[None, :]  # (1, 8H)
        self.whh = jnp.stack(whh_list, axis=0)             # (2, H, 4H)
        self.hidden_size = H
        self.lstm_time_block = lstm_time_block
        self.proj_time_block = proj_time_block

    def __call__(self, BERTSeqIn, DataSeqIn, lLensSeqin):
        # token_type_ids (same construction as the PyTorch forward).
        T_bert = BERTSeqIn.shape[1]
        pos = jnp.arange(T_bert)[None, :]
        token_type_ids = (pos >= jnp.asarray(lLensSeqin)[:, None]).astype(jnp.int32)
        del token_type_ids
        # TODO(synk): BERTModel is an externally injected module (no fixed arch); not replicated.
        bert_outputs = None

        # Embedding: plain gather (bandwidth-optimal, no one-hot).  Dropout in eval = identity.
        emb = jnp.take(self.table, DataSeqIn, axis=0)      # (B, T, E)

        # Kernel 1: hoisted input projection (both directions) + embedding time-mean.
        gx, emb_mean = input_projection_and_mean(
            emb, self.w_proj, self.b_proj, time_block=self.proj_time_block)

        # Kernel 2: fused bidirectional recurrence.
        out2 = bidirectional_lstm(gx, self.whh, time_block=self.lstm_time_block)  # (2,B,T,H)
        outputs = jnp.concatenate([out2[0], out2[1]], axis=-1)   # (B, T, 2H) = [fwd | bwd]

        mean_cat = jnp.concatenate([emb_mean, emb_mean], axis=1)  # (B, 2E)
        return bert_outputs, mean_cat, outputs


# ----------------------------------------------------------------------------
# Pure-JAX reference (for numerical verification; PyTorch layout / gate order)
# ----------------------------------------------------------------------------
def _lstm_ref(x_bte, w_ih, w_hh, b_ih, b_hh):
    B, T, E = x_bte.shape
    H = w_hh.shape[1]

    def step(carry, x_t):
        h, c = carry
        gates = x_t @ w_ih.T + h @ w_hh.T + b_ih + b_hh
        i = jax.nn.sigmoid(gates[:, 0 * H:1 * H])
        f = jax.nn.sigmoid(gates[:, 1 * H:2 * H])
        g = jnp.tanh(gates[:, 2 * H:3 * H])
        o = jax.nn.sigmoid(gates[:, 3 * H:4 * H])
        c = f * c + i * g
        h = o * jnp.tanh(c)
        return (h, c), h

    init = (jnp.zeros((B, H), jnp.float32), jnp.zeros((B, H), jnp.float32))
    _, hs = lax.scan(step, init, jnp.transpose(x_bte, (1, 0, 2)))
    return jnp.transpose(hs, (1, 0, 2))


if __name__ == "__main__":
    # Small shapes consistent with the module; 4H = 128 lanes, LSTM grid = (2 dirs, 2 time blocks).
    V, E, H = 64, 32, 32          # input_size, emb_size, hidden_size
    pad_idx = 0
    B, T, T_bert = 2, 16, 10

    key = jax.random.PRNGKey(0)
    k_ids, k_bert, k_model = jax.random.split(key, 3)

    DataSeqIn = jax.random.randint(k_ids, (B, T), 0, V, jnp.int32)
    BERTSeqIn = jax.random.randint(k_bert, (B, T_bert), 0, V, jnp.int32)
    lLensSeqin = [5, 7]

    enc = EncoderRNNPallas(V, E, pad_idx, H, k_model)
    bert_out, mean_cat, outputs = enc(BERTSeqIn, DataSeqIn, lLensSeqin)
    jax.block_until_ready((mean_cat, outputs))

    # Verify against a pure-JAX reference.
    emb_ref = enc.table[DataSeqIn]                                       # (B,T,E)
    mean_ref = jnp.concatenate([emb_ref.mean(1), emb_ref.mean(1)], axis=1)
    pf, pb = enc.params["fwd"], enc.params["bwd"]
    of = _lstm_ref(emb_ref, pf["w_ih"], pf["w_hh"], pf["b_ih"], pf["b_hh"])
    ob = _lstm_ref(emb_ref[:, ::-1], pb["w_ih"], pb["w_hh"], pb["b_ih"], pb["b_hh"])[:, ::-1]
    out_ref = jnp.concatenate([of, ob], axis=-1)

    np.testing.assert_allclose(np.asarray(mean_cat), np.asarray(mean_ref), atol=2e-5, rtol=2e-5)
    np.testing.assert_allclose(np.asarray(outputs), np.asarray(out_ref), atol=2e-5, rtol=2e-5)

    assert mean_cat.shape == (B, 2 * E)
    assert outputs.shape == (B, T, 2 * H)
    print("KERNEL_OK")
</pallas_src>

<mosaic_0001>
module attributes {stable_mosaic.version = 11 : i64} {
  func.func @_input_proj_kernel(%arg0: i32, %arg1: memref<2x16x32xf32, #tpu.memory_space<vmem>>, %arg2: memref<32x256xf32, #tpu.memory_space<vmem>>, %arg3: memref<1x256xf32, #tpu.memory_space<vmem>>, %arg4: memref<2x2x16x128xf32, #tpu.memory_space<vmem>>, %arg5: memref<2x32xf32, #tpu.memory_space<vmem>>) attributes {dimension_semantics = [#tpu.dimension_semantics<arbitrary>], iteration_bounds = array<i64: 1>, scalar_prefetch = 0 : i64, scratch_operands = 0 : i64, tpu.core_type = #tpu.core_type<tc>, window_params = [{transform_indices = @transform_0, window_bounds = array<i64: 2, 16, 32>}, {pipeline_mode = #tpu.pipeline_mode<synchronous>, transform_indices = @transform_1, window_bounds = array<i64: 32, 256>}, {pipeline_mode = #tpu.pipeline_mode<synchronous>, transform_indices = @transform_2, window_bounds = array<i64: 1, 256>}, {transform_indices = @transform_3, window_bounds = array<i64: 2, 2, 16, 128>}, {pipeline_mode = #tpu.pipeline_mode<synchronous>, transform_indices = @transform_4, window_bounds = array<i64: 2, 32>}]} {
    %c0_i32 = arith.constant 0 : i32
    %0 = arith.cmpi eq, %arg0, %c0_i32 : i32
    %1 = arith.extui %0 : i1 to i32
    %c0_i32_0 = arith.constant 0 : i32
    %2 = arith.cmpi ne, %1, %c0_i32_0 : i32
    scf.if %2 {
      %cst_21 = arith.constant 0.000000e+00 : f32
      %26 = vector.broadcast %cst_21 : f32 to vector<2x32xf32>
      %c0_22 = arith.constant 0 : index
      %c0_23 = arith.constant 0 : index
      %27 = vector.load %arg5[%c0_22, %c0_23] : memref<2x32xf32, #tpu.memory_space<vmem>>, vector<2x32xf32>
      tpu.vector_store %arg5[%c0_22, %c0_23], %26 {strides = array<i32>} : memref<2x32xf32, #tpu.memory_space<vmem>>, vector<2x32xf32>,
    } else {
    }
    %c0 = arith.constant 0 : index
    %c0_1 = arith.constant 0 : index
    %c0_2 = arith.constant 0 : index
    %3 = vector.load %arg1[%c0, %c0_1, %c0_2] : memref<2x16x32xf32, #tpu.memory_space<vmem>>, vector<2x16x32xf32>
    %4 = vector.shape_cast %3 : vector<2x16x32xf32> to vector<32x32xf32>
    %c0_3 = arith.constant 0 : index
    %c0_4 = arith.constant 0 : index
    %5 = vector.load %arg2[%c0_3, %c0_4] : memref<32x256xf32, #tpu.memory_space<vmem>>, vector<32x256xf32>
    %cst = arith.constant dense<0.000000e+00> : vector<32x256xf32>
    %6 = tpu.matmul %4, %5, %cst {dimension_numbers = #tpu.dot_dimension_numbers<[1], [0], [0], [1], [0, 0, 1, 1], [], []>} : vector<32x32xf32>, vector<32x256xf32>, vector<32x256xf32> -> vector<32x256xf32>
    %c0_5 = arith.constant 0 : index
    %c0_6 = arith.constant 0 : index
    %7 = vector.load %arg3[%c0_5, %c0_6] : memref<1x256xf32, #tpu.memory_space<vmem>>, vector<1x256xf32>
    %8 = vector.broadcast %7 : vector<1x256xf32> to vector<32x256xf32>
    %9 = arith.addf %6, %8 : vector<32x256xf32>
    %10 = vector.shape_cast %9 : vector<32x256xf32> to vector<2x16x256xf32>
    %11 = vector.extract_strided_slice %10 {offsets = [0, 0, 0], sizes = [2, 16, 128], strides = [1, 1, 1]} : vector<2x16x256xf32> to vector<2x16x128xf32>
    %c0_7 = arith.constant 0 : index
    %c0_8 = arith.constant 0 : index
    %c0_9 = arith.constant 0 : index
    %c0_10 = arith.constant 0 : index
    %12 = vector.load %arg4[%c0_7, %c0_8, %c0_9, %c0_10] : memref<2x2x16x128xf32, #tpu.memory_space<vmem>>, vector<1x2x16x128xf32>
    %13 = vector.shape_cast %12 : vector<1x2x16x128xf32> to vector<2x16x128xf32>
    %14 = vector.shape_cast %11 : vector<2x16x128xf32> to vector<1x2x16x128xf32>
    tpu.vector_store %arg4[%c0_7, %c0_8, %c0_9, %c0_10], %14 {strides = array<i32>} : memref<2x2x16x128xf32, #tpu.memory_space<vmem>>, vector<1x2x16x128xf32>,
    %15 = vector.extract_strided_slice %10 {offsets = [0, 0, 128], sizes = [2, 16, 128], strides = [1, 1, 1]} : vector<2x16x256xf32> to vector<2x16x128xf32>
    %c1 = arith.constant 1 : index
    %c0_11 = arith.constant 0 : index
    %c0_12 = arith.constant 0 : index
    %c0_13 = arith.constant 0 : index
    %16 = vector.load %arg4[%c1, %c0_11, %c0_12, %c0_13] : memref<2x2x16x128xf32, #tpu.memory_space<vmem>>, vector<1x2x16x128xf32>
    %17 = vector.shape_cast %16 : vector<1x2x16x128xf32> to vector<2x16x128xf32>
    %18 = vector.shape_cast %15 : vector<2x16x128xf32> to vector<1x2x16x128xf32>
    tpu.vector_store %arg4[%c1, %c0_11, %c0_12, %c0_13], %18 {strides = array<i32>} : memref<2x2x16x128xf32, #tpu.memory_space<vmem>>, vector<1x2x16x128xf32>,
    %c0_14 = arith.constant 0 : index
    %c0_15 = arith.constant 0 : index
    %19 = vector.load %arg5[%c0_14, %c0_15] : memref<2x32xf32, #tpu.memory_space<vmem>>, vector<2x32xf32>
    %cst_16 = arith.constant dense<0.000000e+00> : vector<2x32xf32>
    %20 = vector.multi_reduction <add>, %3, %cst_16 [1] : vector<2x16x32xf32> to vector<2x32xf32>
    %21 = arith.addf %19, %20 : vector<2x32xf32>
    %c0_17 = arith.constant 0 : index
    %c0_18 = arith.constant 0 : index
    %22 = vector.load %arg5[%c0_17, %c0_18] : memref<2x32xf32, #tpu.memory_space<vmem>>, vector<2x32xf32>
    tpu.vector_store %arg5[%c0_17, %c0_18], %21 {strides = array<i32>} : memref<2x32xf32, #tpu.memory_space<vmem>>, vector<2x32xf32>,
    %c0_i32_19 = arith.constant 0 : i32
    %23 = arith.cmpi eq, %arg0, %c0_i32_19 : i32
    %24 = arith.extui %23 : i1 to i32
    %c0_i32_20 = arith.constant 0 : i32
    %25 = arith.cmpi ne, %24, %c0_i32_20 : i32
    scf.if %25 {
      %c0_21 = arith.constant 0 : index
      %c0_22 = arith.constant 0 : index
      %26 = vector.load %arg5[%c0_21, %c0_22] : memref<2x32xf32, #tpu.memory_space<vmem>>, vector<2x32xf32>
      %cst_23 = arith.constant 6.250000e-02 : f32
      %27 = vector.broadcast %cst_23 : f32 to vector<2x32xf32>
      %28 = arith.mulf %26, %27 : vector<2x32xf32>
      %c0_24 = arith.constant 0 : index
      %c0_25 = arith.constant 0 : index
      %29 = vector.load %arg5[%c0_24, %c0_25] : memref<2x32xf32, #tpu.memory_space<vmem>>, vector<2x32xf32>
      tpu.vector_store %arg5[%c0_24, %c0_25], %28 {strides = array<i32>} : memref<2x32xf32, #tpu.memory_space<vmem>>, vector<2x32xf32>,
    } else {
    }
    return
  }
  func.func @transform_0(%arg0: i32) -> (i32, i32, i32) {
    %c0_i32 = arith.constant 0 : i32
    %c0_i32_0 = arith.constant 0 : i32
    %c0_i32_1 = arith.constant 0 : i32
    return %c0_i32, %arg0, %c0_i32_0 : i32, i32, i32
  }
  func.func @transform_1(%arg0: i32) -> (i32, i32) {
    %c0_i32 = arith.constant 0 : i32
    %c0_i32_0 = arith.constant 0 : i32
    %c0_i32_1 = arith.constant 0 : i32
    return %c0_i32, %c0_i32_0 : i32, i32
  }
  func.func @transform_2(%arg0: i32) -> (i32, i32) {
    %c0_i32 = arith.constant 0 : i32
    %c0_i32_0 = arith.constant 0 : i32
    %c0_i32_1 = arith.constant 0 : i32
    return %c0_i32, %c0_i32_0 : i32, i32
  }
  func.func @transform_3(%arg0: i32) -> (i32, i32, i32, i32) {
    %c0_i32 = arith.constant 0 : i32
    %c0_i32_0 = arith.constant 0 : i32
    %c0_i32_1 = arith.constant 0 : i32
    %c0_i32_2 = arith.constant 0 : i32
    return %c0_i32, %c0_i32_0, %arg0, %c0_i32_1 : i32, i32, i32, i32
  }
  func.func @transform_4(%arg0: i32) -> (i32, i32) {
    %c0_i32 = arith.constant 0 : i32
    %c0_i32_0 = arith.constant 0 : i32
    %c0_i32_1 = arith.constant 0 : i32
    return %c0_i32, %c0_i32_0 : i32, i32
  }
}

</mosaic_0001>

<llo_original>
// kernel: tpu_custom_call.1
$region0: #{tpu_custom_call.1}
  #allocation0 [shape = 'u32[]', space=smem, size = 0x4, offset = 0x4, fixed_abs, tag = 'smem constant byte address 0x4 - core index']
  #allocation1 [shape = 'u32[72,128]{1,0:T(1,128)}', space=vmem, size = 0x9000, scoped, tag = 'internal scratch']
  %s0 = inlined_call_operand.hbm [shape: f32[2,16,32], index: 0, kind: input, shape index: {}]
  %s1 = inlined_call_operand.hbm [shape: f32[32,256], index: 1, kind: input, shape index: {}]
  %s2 = inlined_call_operand.hbm [shape: f32[1,256], index: 2, kind: input, shape index: {}]
  %s3 = inlined_call_operand.hbm [shape: f32[2,2,16,128], index: 3, kind: output, shape index: {0}]
  %s4 = inlined_call_operand.hbm [shape: f32[2,32], index: 4, kind: output, shape index: {1}]
  %5 = xla_tuple %s3, %s4
  %s6 = sld [smem:[#allocation0]]
  $region50: #{tpu_custom_call.1} parent=0
    _
  %s8 = ssub.s32 1, %s6
  %s9 = scalar_select 0, %s8, %s6
  $region1: #{tpu_custom_call.1} parent=0
    #allocation2 [shape = 'u8[16384]{0}', space=vmem, size = 0x4000, scoped, tag = 'input window, operand 0, single buffered']
    #allocation3 [shape = 's32[1]{0}', space=sflag, size = 0x4, scoped, tag = 'scoped memory for tpu_custom_call.1']
    #allocation4 [shape = 's32[1]{0}', space=sflag, size = 0x4, scoped, tag = 'scoped memory for tpu_custom_call.1']
    #allocation5 [shape = 'u8[32768]{0}', space=vmem, size = 0x8000, scoped, tag = 'input window, operand 1, single buffered']
    #allocation6 [shape = 's32[1]{0}', space=sflag, size = 0x4, scoped, tag = 'scoped memory for tpu_custom_call.1']
    #allocation7 [shape = 'u8[1024]{0}', space=vmem, size = 0x400, scoped, tag = 'input window, operand 2, single buffered']
    #allocation8 [shape = 'u8[32768]{0}', space=vmem, size = 0x8000, scoped, tag = 'output window, operand 0, single buffered']
    #allocation9 [shape = 'u8[1024]{0}', space=vmem, size = 0x400, scoped, tag = 'output window, operand 1, single buffered']
    #allocation10 [shape = 's32[1]{0}', space=sflag, size = 0x4, scoped, tag = 'scoped memory for tpu_custom_call.1']
    %10 = vsyncpa [#allocation3], 0
    %11 = vsyncpa [#allocation6], 0
    %12 = vsyncpa [#allocation4], 0
    %13 = vsyncpa [#allocation10], 0
    // Predicated region
    $region2: #{tpu_custom_call.1} parent=1 // pred_check
      _
    $region3: #{tpu_custom_call.1} parent=1 // pred_check_branch
      %15 = sbr.rel (0) target = $region5
    $region4: #{tpu_custom_call.1} parent=1 // pred_region
      %17 = vsyncadd [#allocation3], 0
      %s18 = sshll.u32 %s0, 4
      %s19 = int_to_ptr.hbm [resolvable:$true] %s18
      %s20 = sshll.u32 [#allocation2], 4
      %s21 = int_to_ptr.vmem [resolvable:$true] %s20
      %26 = dma.hbm_to_vmem [thread:$0]  %s19, 512, %s21, [#allocation3], 128, 128, 8
    $region5: #{tpu_custom_call.1} parent=1 // pred_fallthru
      _
    // Predicated region
    $region6: #{tpu_custom_call.1} parent=1 // pred_check
      _
    $region7: #{tpu_custom_call.1} parent=1 // pred_check_branch
      %28 = sbr.rel (0) target = $region9
    $region8: #{tpu_custom_call.1} parent=1 // pred_region
      %30 = vsyncadd [#allocation6], 0
      %s31 = sshll.u32 %s1, 4
      %s32 = int_to_ptr.hbm [resolvable:$true] %s31
      %s33 = sshll.u32 [#allocation5], 4
      %s34 = int_to_ptr.vmem [resolvable:$true] %s33
      %39 = dma.hbm_to_vmem [thread:$0]  %s32, 1024, %s34, [#allocation6], 256, 256, 16
    $region9: #{tpu_custom_call.1} parent=1 // pred_fallthru
      _
    // Predicated region
    $region10: #{tpu_custom_call.1} parent=1 // pred_check
      _
    $region11: #{tpu_custom_call.1} parent=1 // pred_check_branch
      %41 = sbr.rel (0) target = $region13
    $region12: #{tpu_custom_call.1} parent=1 // pred_region
      %43 = vsyncadd [#allocation6], 0
      %s45 = sshll.u32 %s2, 4
      %s46 = int_to_ptr.hbm [resolvable:$true] %s45
      %s47 = sshll.u32 [#allocation7], 4
      %s48 = int_to_ptr.vmem [resolvable:$true] %s47
      %50 = dma.hbm_to_vmem [thread:$0]  %s46, 32, %s48, [#allocation6]
    $region13: #{tpu_custom_call.1} parent=1 // pred_fallthru
      _
    // Predicated region
    $region14: #{tpu_custom_call.1} parent=1 // pred_check
      _
    $region15: #{tpu_custom_call.1} parent=1 // pred_check_branch
      %52 = sbr.rel (0) target = $region17
    $region16: #{tpu_custom_call.1} parent=1 // pred_region
      %54 = dma.done [#allocation3], 512
    $region17: #{tpu_custom_call.1} parent=1 // pred_fallthru
      _
    // Predicated region
    $region18: #{tpu_custom_call.1} parent=1 // pred_check
      _
    $region19: #{tpu_custom_call.1} parent=1 // pred_check_branch
      %56 = sbr.rel (0) target = $region21
    $region20: #{tpu_custom_call.1} parent=1 // pred_region
      %58 = dma.done [#allocation6], 1024
    $region21: #{tpu_custom_call.1} parent=1 // pred_fallthru
      _
    // Predicated region
    $region22: #{tpu_custom_call.1} parent=1 // pred_check
      _
    $region23: #{tpu_custom_call.1} parent=1 // pred_check_branch
      %60 = sbr.rel (0) target = $region25
    $region24: #{tpu_custom_call.1} parent=1 // pred_region
      %62 = dma.done [#allocation6], 32
    $region25: #{tpu_custom_call.1} parent=1 // pred_fallthru
      _
    %p63 = scmp.eq.s32.totalorder 0, 0
    // Predicated region
    $region26: #{tpu_custom_call.1} parent=1 // pred_check
      %p64 = pneg %p63
    $region27: #{tpu_custom_call.1} parent=1 // pred_check_branch
      %66 = sbr.rel (%p64) target = $region29
    $region28: #{tpu_custom_call.1} parent=1 // pred_region
      %vm67 = vcmask 254976
      %68 = vst.msk [vmem:[#allocation9] sm:$0x3] %vm67, 0.0
    $region29: #{tpu_custom_call.1} parent=1 // pred_fallthru
      _
    %v69 = vld [vmem:[#allocation2] sm:$0xff]
    %v70 = vld [vmem:[#allocation2 + $0x8] sm:$0xff]
    %v71 = vld [vmem:[#allocation2 + $0x10] sm:$0xff]
    %v72 = vld [vmem:[#allocation2 + $0x18] sm:$0xff]
    %v73 = vld [vmem:[#allocation5] sm:$0xff]
    %v74 = vld [vmem:[#allocation5 + $0x8] sm:$0xff]
    %v75 = vld [vmem:[#allocation5 + $0x10] sm:$0xff]
    %v76 = vld [vmem:[#allocation5 + $0x18] sm:$0xff]
    %v77 = vld [vmem:[#allocation5 + $0x20] sm:$0xff]
    %v78 = vld [vmem:[#allocation5 + $0x28] sm:$0xff]
    %v79 = vld [vmem:[#allocation5 + $0x30] sm:$0xff]
    %v80 = vld [vmem:[#allocation5 + $0x38] sm:$0xff]
    %v81 = vld [vmem:[#allocation7] sm:$0x3]
    %v83 = vperm.slane %v81, 0
    %v84 = vperm.slane %v81, 1
    %vm87 = vcmask 261120
    %v89 = vsel %vm87, %v69, 0
    %v92 = vsel %vm87, %v70, 0
    %v95 = vsel %vm87, %v71, 0
    %v98 = vsel %vm87, %v72, 0
    %100 = vmatpush.msra.mxu0 0.0
    %101 = vmatpush.msra.mxu0 0.0
    %102 = vmatpush.msra.mxu0 0.0
    %103 = vmatpush.msra.mxu0 0.0
    %104 = vmatpush.msra.mxu0 0.0
    %105 = vmatpush.msra.mxu0 0.0
    %106 = vmatpush.msra.mxu0 0.0
    %107 = vmatpush.msra.mxu0 0.0
    %108 = vmatpush.msra.mxu0 0.0
    %109 = vmatpush.msra.mxu0 0.0
    %110 = vmatpush.msra.mxu0 0.0
    %111 = vmatpush.msra.mxu0 0.0
    %112 = vmatpush.msra.mxu0 %v79
    %113 = vmatpush.msra.mxu0 %v77
    %114 = vmatpush.msra.mxu0 %v75
    %115 = vmatpush.msra.mxu0 %v73
    %116 = vmatmul.f32.gmra.mxu0 %v89
    %v117 = vpop.f32.mrf.mxu0
    %v118 = vadd.f32 %v83, %v117
    %119 = vmatmul.f32.gmra.mxu0 %v92
    %v120 = vpop.f32.mrf.mxu0
    %v121 = vadd.f32 %v83, %v120
    %122 = vmatmul.f32.gmra.mxu0 %v95
    %v123 = vpop.f32.mrf.mxu0
    %v124 = vadd.f32 %v83, %v123
    %125 = vmatmul.f32.gmra.mxu0 %v98
    %v126 = vpop.f32.mrf.mxu0
    %v127 = vadd.f32 %v83, %v126
    %128 = vdwg.mxu0
    %129 = vmatpush.msra.mxu0 0.0
    %130 = vmatpush.msra.mxu0 0.0
    %131 = vmatpush.msra.mxu0 0.0
    %132 = vmatpush.msra.mxu0 0.0
    %133 = vmatpush.msra.mxu0 0.0
    %134 = vmatpush.msra.mxu0 0.0
    %135 = vmatpush.msra.mxu0 0.0
    %136 = vmatpush.msra.mxu0 0.0
    %137 = vmatpush.msra.mxu0 0.0
    %138 = vmatpush.msra.mxu0 0.0
    %139 = vmatpush.msra.mxu0 0.0
    %140 = vmatpush.msra.mxu0 0.0
    %141 = vmatpush.msra.mxu0 %v80
    %142 = vmatpush.msra.mxu0 %v78
    %143 = vmatpush.msra.mxu0 %v76
    %144 = vmatpush.msra.mxu0 %v74
    %145 = vmatmul.f32.gmra.mxu0 %v89
    %v146 = vpop.f32.mrf.mxu0
    %v147 = vadd.f32 %v84, %v146
    %148 = vmatmul.f32.gmra.mxu0 %v92
    %v149 = vpop.f32.mrf.mxu0
    %v150 = vadd.f32 %v84, %v149
    %151 = vmatmul.f32.gmra.mxu0 %v95
    %v152 = vpop.f32.mrf.mxu0
    %v153 = vadd.f32 %v84, %v152
    %154 = vmatmul.f32.gmra.mxu0 %v98
    %v155 = vpop.f32.mrf.mxu0
    %v156 = vadd.f32 %v84, %v155
    %157 = vdwg.mxu0
    %158 = vst [vmem:[#allocation8] sm:$0xff] %v118
    %159 = vst [vmem:[#allocation8 + $0x8] sm:$0xff] %v121
    %160 = vst [vmem:[#allocation8 + $0x10] sm:$0xff] %v124
    %161 = vst [vmem:[#allocation8 + $0x18] sm:$0xff] %v127
    %s162 = scalar_lea.vmem [#allocation8], 32
    %163 = vst [vmem:[%s162] sm:$0xff] %v147
    %164 = vst [vmem:[%s162 + $0x8] sm:$0xff] %v150
    %165 = vst [vmem:[%s162 + $0x10] sm:$0xff] %v153
    %166 = vst [vmem:[%s162 + $0x18] sm:$0xff] %v156
    %v167 = vld [vmem:[#allocation9] sm:$0x3]
    %v168 = vsel %vm87, %v69, 0.0
    %v169 = vsel %vm87, %v70, 0.0
    %v170 = vadd.f32 %v168, %v169
    %v171 = vrot.slane %v170, 4
    %v172 = vadd.f32 %v170, %v171
    %v173 = vrot.slane %v172, 2
    %v174 = vadd.f32 %v172, %v173
    %v175 = vrot.slane %v174, 1
    %v176 = vadd.f32 %v174, %v175
    %v177 = vsel %vm87, %v71, 0.0
    %v178 = vsel %vm87, %v72, 0.0
    %v179 = vadd.f32 %v177, %v178
    %v180 = vrot.slane %v179, 4
    %v181 = vadd.f32 %v179, %v180
    %v182 = vrot.slane %v181, 2
    %v183 = vadd.f32 %v181, %v182
    %v184 = vrot.slane %v183, 1
    %v185 = vadd.f32 %v183, %v184
    %vm188 = vcmask 1041409
    %v189 = vsel %vm188, %v185, %v176
    %v191 = vadd.f32 %v167, %v189
    %vm192 = vcmask 254976
    %193 = vst.msk [vmem:[#allocation9] sm:$0x3] %vm192, %v191
    // Predicated region
    $region30: #{tpu_custom_call.1} parent=1 // pred_check
      %p194 = pneg %p63
    $region31: #{tpu_custom_call.1} parent=1 // pred_check_branch
      %196 = sbr.rel (%p194) target = $region33
    $region32: #{tpu_custom_call.1} parent=1 // pred_region
      %v197 = vld [vmem:[#allocation9] sm:$0x3]
      %v198 = vmul.f32 %v197, 0.0625
      %199 = vst.msk [vmem:[#allocation9] sm:$0x3] %vm192, %v198
    $region33: #{tpu_custom_call.1} parent=1 // pred_fallthru
      _
    // Predicated region
    $region34: #{tpu_custom_call.1} parent=1 // pred_check
      _
    $region35: #{tpu_custom_call.1} parent=1 // pred_check_branch
      %201 = sbr.rel (0) target = $region37
    $region36: #{tpu_custom_call.1} parent=1 // pred_region
      %203 = vsyncadd [#allocation4], 0
      %s204 = sshll.u32 [#allocation8], 4
      %s205 = int_to_ptr.vmem [resolvable:$true] %s204
      %s206 = sshll.u32 %s3, 4
      %s207 = int_to_ptr.hbm [resolvable:$true] %s206
      %212 = dma.vmem_to_hbm [thread:$0]  %s205, 1024, %s207, [#allocation4], 128, 128, 8
    $region37: #{tpu_custom_call.1} parent=1 // pred_fallthru
      _
    // Predicated region
    $region38: #{tpu_custom_call.1} parent=1 // pred_check
      _
    $region39: #{tpu_custom_call.1} parent=1 // pred_check_branch
      %214 = sbr.rel (0) target = $region41
    $region40: #{tpu_custom_call.1} parent=1 // pred_region
      %216 = vsyncadd [#allocation10], 0
      %s218 = sshll.u32 [#allocation9], 4
      %s219 = int_to_ptr.vmem [resolvable:$true] %s218
      %s220 = sshll.u32 %s4, 4
      %s221 = int_to_ptr.hbm [resolvable:$true] %s220
      %223 = dma.vmem_to_hbm [thread:$0]  %s219, 32, %s221, [#allocation10]
    $region41: #{tpu_custom_call.1} parent=1 // pred_fallthru
      _
    // Predicated region
    $region42: #{tpu_custom_call.1} parent=1 // pred_check
      _
    $region43: #{tpu_custom_call.1} parent=1 // pred_check_branch
      %225 = sbr.rel (0) target = $region45
    $region44: #{tpu_custom_call.1} parent=1 // pred_region
      %227 = dma.done [#allocation4], 1024
    $region45: #{tpu_custom_call.1} parent=1 // pred_fallthru
      _
    // Predicated region
    $region46: #{tpu_custom_call.1} parent=1 // pred_check
      _
    $region47: #{tpu_custom_call.1} parent=1 // pred_check_branch
      %229 = sbr.rel (0) target = $region49
    $region48: #{tpu_custom_call.1} parent=1 // pred_region
      %231 = dma.done [#allocation10], 32
    $region49: #{tpu_custom_call.1} parent=1 // pred_fallthru
      _
    %232 = vsyncpa [#allocation3], 1
    %233 = vsyncpa [#allocation6], 1
    %234 = vsyncpa [#allocation4], 1
    %235 = vsyncpa [#allocation10], 1

</llo_original>
